<compile_context>
chip_gen: v5e
topology: v5e:2x2
jax: 0.10.0
libtpu: 0.0.40
codegen_flags: <defaults>
</compile_context>

<pallas_src>
import functools

import jax
import jax.numpy as jnp
from jax.experimental import pallas as pl
from jax.experimental.pallas import tpu as pltpu


def _focal_loss_kernel(logits_ref, tgt_ref, out_ref, acc_ref,
                       *, alpha, gamma, total_n, needs_mask):
    p = pl.program_id(0)          # split index (parallel, megacore)
    t = pl.program_id(1)          # tile index within split (arbitrary)

    @pl.when(t == 0)
    def _():
        acc_ref[...] = jnp.zeros_like(acc_ref)

    logits = logits_ref[...].astype(jnp.float32)          # (TN, C) like inputs.float()
    tgt = tgt_ref[...]                                     # (TN, 1) int32
    tile_n = logits.shape[0]

    # Numerically stable softmax pieces (one exp pass, one log per row).
    m = jnp.max(logits, axis=-1, keepdims=True)            # (TN, 1)
    shifted = logits - m
    e = jnp.exp(shifted)
    sum_exp = jnp.sum(e, axis=-1, keepdims=True)           # (TN, 1)

    # Gather the target class via vectorized one-hot compare (no scalar loop).
    col = jax.lax.broadcasted_iota(jnp.int32, logits.shape, 1)
    hit = col == tgt
    tgt_shift = jnp.sum(jnp.where(hit, shifted, 0.0), axis=-1, keepdims=True)
    tgt_exp = jnp.sum(jnp.where(hit, e, 0.0), axis=-1, keepdims=True)

    ce = jnp.log(sum_exp) - tgt_shift                       # (TN, 1)
    pt = tgt_exp / sum_exp                                  # == exp(-ce), reuses e

    one_minus_pt = 1.0 - pt
    g = float(gamma)
    if g == int(g) and 0 <= int(g) <= 4:
        w = jnp.ones_like(one_minus_pt)
        for _ in range(int(g)):                             # gamma=2 -> (1-pt)*(1-pt)
            w = w * one_minus_pt
    else:
        w = one_minus_pt ** g
    fl = alpha * w * ce                                     # (TN, 1)

    if needs_mask:
        # Zero out padded tail rows.
        row_base = (p * pl.num_programs(1) + t) * tile_n
        rows = row_base + jax.lax.broadcasted_iota(jnp.int32, fl.shape, 0)
        fl = jnp.where(rows < total_n, fl, 0.0)

    acc_ref[...] += fl                                      # VPU-only per-step work

    @pl.when(t == pl.num_programs(1) - 1)
    def _():
        s = jnp.sum(acc_ref[...])                           # single XLU reduce at end
        ri = jax.lax.broadcasted_iota(jnp.int32, out_ref.shape, 0)
        ci = jax.lax.broadcasted_iota(jnp.int32, out_ref.shape, 1)
        out_ref[...] = jnp.where((ri == 0) & (ci == 0), s, 0.0)


def focal_loss(inputs, targets, *, alpha=0.25, gamma=2, reduction="mean",
               tile_n=None, vmem_budget_per_buf=4 << 20):
    """Pallas TPU implementation of FocalLoss.forward.

    inputs : (N, C) logits (f32/bf16/...; cast to f32 inside the kernel)
    targets: (N,)   integer class indices
    returns: scalar f32
    """
    N, C = inputs.shape

    if tile_n is None:
        # Rows per tile so one (tile_n, C) tile stays under the per-buffer
        # budget; double-buffered this is <= ~8 MiB, safe on all generations.
        bytes_per_row = max(1, C * inputs.dtype.itemsize)
        rows = (vmem_budget_per_buf // bytes_per_row) // 8 * 8
        rows = max(8, min(rows, 2048))
        tile_n = min(rows, max(8, ((N + 7) // 8) * 8))
    assert tile_n % 8 == 0, "tile_n must be a multiple of 8"

    num_tiles = pl.cdiv(N, tile_n)
    n_splits = 2 if num_tiles >= 2 else 1       # megacore partial sums (v7x)
    tiles_per_split = pl.cdiv(num_tiles, n_splits)
    padded_n = n_splits * tiles_per_split * tile_n

    tgt2d = targets.astype(jnp.int32).reshape(N, 1)
    if padded_n != N:
        inputs = jnp.pad(inputs, ((0, padded_n - N), (0, 0)))
        tgt2d = jnp.pad(tgt2d, ((0, padded_n - N), (0, 0)))

    kernel = functools.partial(
        _focal_loss_kernel,
        alpha=float(alpha),
        gamma=float(gamma),
        total_n=N,
        needs_mask=(padded_n != N),
    )

    partials = pl.pallas_call(
        kernel,
        # One lane-aligned (8, 128) block per split; partial sum lives at [0, 0]
        # of each block, the rest is written as zeros.
        out_shape=jax.ShapeDtypeStruct((n_splits * 8, 128), jnp.float32),
        grid_spec=pltpu.PrefetchScalarGridSpec(
            num_scalar_prefetch=0,
            grid=(n_splits, tiles_per_split),
            in_specs=[
                pl.BlockSpec((tile_n, C),
                             lambda p, t: (p * tiles_per_split + t, 0)),
                pl.BlockSpec((tile_n, 1),
                             lambda p, t: (p * tiles_per_split + t, 0)),
            ],
            out_specs=pl.BlockSpec((8, 128), lambda p, t: (p, 0)),
            scratch_shapes=[pltpu.VMEM((tile_n, 1), jnp.float32)],
        ),
        compiler_params=pltpu.CompilerParams(
            dimension_semantics=("parallel", "arbitrary"),
            vmem_limit_bytes=32 << 20,
        ),
    )(inputs, tgt2d)

    total = jnp.sum(partials)          # zeros everywhere except the per-split sums
    if reduction == "sum":
        return total
    return total / jnp.float32(N)


def _focal_loss_ref(inputs, targets, alpha=0.25, gamma=2, reduction="mean"):
    """Plain-JAX reference mirroring the PyTorch module."""
    logits = inputs.astype(jnp.float32)
    logp = jax.nn.log_softmax(logits, axis=-1)
    ce = -jnp.take_along_axis(logp, targets.astype(jnp.int32)[:, None], axis=-1)[:, 0]
    pt = jnp.exp(-ce)
    fl = alpha * (1.0 - pt) ** gamma * ce
    return jnp.sum(fl) if reduction == "sum" else jnp.mean(fl)


if __name__ == "__main__":
    key = jax.random.PRNGKey(0)
    k1, k2, k3, k4 = jax.random.split(key, 4)

    # Case 1: small, evenly divisible batch, reduction='mean' (default path).
    N1, C1 = 16, 32
    x1 = jax.random.normal(k1, (N1, C1), dtype=jnp.float32) * 2.0
    t1 = jax.random.randint(k2, (N1,), 0, C1, dtype=jnp.int32)
    out1 = jax.block_until_ready(focal_loss(x1, t1, alpha=0.25, gamma=2,
                                            reduction="mean"))
    ref1 = _focal_loss_ref(x1, t1, alpha=0.25, gamma=2, reduction="mean")
    assert jnp.allclose(out1, ref1, rtol=1e-4, atol=1e-6), (out1, ref1)

    # Case 2: ragged N with a small explicit tile -> exercises the 2-way
    # parallel split, tail padding + masking, and reduction='sum'.
    N2, C2 = 100, 32
    x2 = jax.random.normal(k3, (N2, C2), dtype=jnp.float32)
    t2 = jax.random.randint(k4, (N2,), 0, C2, dtype=jnp.int32)
    out2 = jax.block_until_ready(focal_loss(x2, t2, alpha=0.25, gamma=2,
                                            reduction="sum", tile_n=24))
    ref2 = _focal_loss_ref(x2, t2, alpha=0.25, gamma=2, reduction="sum")
    assert jnp.allclose(out2, ref2, rtol=1e-4, atol=1e-5), (out2, ref2)

    print("KERNEL_OK")
</pallas_src>

<mosaic_0001>
module attributes {stable_mosaic.version = 11 : i64} {
  func.func @_focal_loss_kernel(%arg0: i32, %arg1: i32, %arg2: memref<16x32xf32, #tpu.memory_space<vmem>>, %arg3: memref<16x1xi32, #tpu.memory_space<vmem>>, %arg4: memref<8x128xf32, #tpu.memory_space<vmem>>, %arg5: memref<16x1xf32, #tpu.memory_space<vmem>>) attributes {dimension_semantics = [#tpu.dimension_semantics<parallel>, #tpu.dimension_semantics<arbitrary>], iteration_bounds = array<i64: 1, 1>, scalar_prefetch = 0 : i64, scratch_operands = 1 : i64, tpu.core_type = #tpu.core_type<tc>, window_params = [{transform_indices = @transform_0, window_bounds = array<i64: 16, 32>}, {transform_indices = @transform_1, window_bounds = array<i64: 16, 1>}, {transform_indices = @transform_2, window_bounds = array<i64: 8, 128>}]} {
    %c0_i32 = arith.constant 0 : i32
    %0 = arith.cmpi eq, %arg1, %c0_i32 : i32
    %1 = arith.extui %0 : i1 to i32
    %c0_i32_0 = arith.constant 0 : i32
    %2 = arith.cmpi ne, %1, %c0_i32_0 : i32
    scf.if %2 {
      %cst_18 = arith.constant 0.000000e+00 : f32
      %40 = vector.broadcast %cst_18 : f32 to vector<16x1xf32>
      %c0_19 = arith.constant 0 : index
      %c0_20 = arith.constant 0 : index
      %41 = vector.load %arg5[%c0_19, %c0_20] : memref<16x1xf32, #tpu.memory_space<vmem>>, vector<16x1xf32>
      tpu.vector_store %arg5[%c0_19, %c0_20], %40 {strides = array<i32>} : memref<16x1xf32, #tpu.memory_space<vmem>>, vector<16x1xf32>,
    } else {
    }
    %c0 = arith.constant 0 : index
    %c0_1 = arith.constant 0 : index
    %3 = vector.load %arg2[%c0, %c0_1] : memref<16x32xf32, #tpu.memory_space<vmem>>, vector<16x32xf32>
    %c0_2 = arith.constant 0 : index
    %c0_3 = arith.constant 0 : index
    %4 = vector.load %arg3[%c0_2, %c0_3] : memref<16x1xi32, #tpu.memory_space<vmem>>, vector<16x1xi32>
    %cst = arith.constant dense<0xFF800000> : vector<16xf32>
    %5 = vector.multi_reduction <maximumf>, %3, %cst [1] : vector<16x32xf32> to vector<16xf32>
    %6 = vector.shape_cast %5 : vector<16xf32> to vector<16x1xf32>
    %7 = vector.broadcast %6 : vector<16x1xf32> to vector<16x32xf32>
    %8 = arith.subf %3, %7 : vector<16x32xf32>
    %9 = math.exp %8 : vector<16x32xf32>
    %cst_4 = arith.constant dense<0.000000e+00> : vector<16xf32>
    %10 = vector.multi_reduction <add>, %9, %cst_4 [1] : vector<16x32xf32> to vector<16xf32>
    %11 = vector.shape_cast %10 : vector<16xf32> to vector<16x1xf32>
    %12 = tpu.iota {dimensions = array<i32: 1>} : vector<16x32xi32>
    %13 = vector.broadcast %4 : vector<16x1xi32> to vector<16x32xi32>
    %14 = arith.cmpi eq, %12, %13 : vector<16x32xi32>
    %cst_5 = arith.constant 0.000000e+00 : f32
    %15 = vector.broadcast %cst_5 : f32 to vector<16x32xf32>
    %16 = arith.select %14, %8, %15 : vector<16x32xi1>, vector<16x32xf32>
    %cst_6 = arith.constant dense<0.000000e+00> : vector<16xf32>
    %17 = vector.multi_reduction <add>, %16, %cst_6 [1] : vector<16x32xf32> to vector<16xf32>
    %18 = vector.shape_cast %17 : vector<16xf32> to vector<16x1xf32>
    %cst_7 = arith.constant 0.000000e+00 : f32
    %19 = vector.broadcast %cst_7 : f32 to vector<16x32xf32>
    %20 = arith.select %14, %9, %19 : vector<16x32xi1>, vector<16x32xf32>
    %cst_8 = arith.constant dense<0.000000e+00> : vector<16xf32>
    %21 = vector.multi_reduction <add>, %20, %cst_8 [1] : vector<16x32xf32> to vector<16xf32>
    %22 = vector.shape_cast %21 : vector<16xf32> to vector<16x1xf32>
    %23 = math.log %11 : vector<16x1xf32>
    %24 = arith.subf %23, %18 : vector<16x1xf32>
    %25 = arith.divf %22, %11 : vector<16x1xf32>
    %cst_9 = arith.constant 1.000000e+00 : f32
    %26 = vector.broadcast %cst_9 : f32 to vector<16x1xf32>
    %27 = arith.subf %26, %25 : vector<16x1xf32>
    %cst_10 = arith.constant 1.000000e+00 : f32
    %28 = vector.broadcast %cst_10 : f32 to vector<16x1xf32>
    %29 = arith.mulf %28, %27 : vector<16x1xf32>
    %30 = arith.mulf %29, %27 : vector<16x1xf32>
    %cst_11 = arith.constant 2.500000e-01 : f32
    %31 = vector.broadcast %cst_11 : f32 to vector<16x1xf32>
    %32 = arith.mulf %31, %30 : vector<16x1xf32>
    %33 = arith.mulf %32, %24 : vector<16x1xf32>
    %c0_12 = arith.constant 0 : index
    %c0_13 = arith.constant 0 : index
    %34 = vector.load %arg5[%c0_12, %c0_13] : memref<16x1xf32, #tpu.memory_space<vmem>>, vector<16x1xf32>
    %35 = arith.addf %34, %33 : vector<16x1xf32>
    %c0_14 = arith.constant 0 : index
    %c0_15 = arith.constant 0 : index
    %36 = vector.load %arg5[%c0_14, %c0_15] : memref<16x1xf32, #tpu.memory_space<vmem>>, vector<16x1xf32>
    tpu.vector_store %arg5[%c0_14, %c0_15], %35 {strides = array<i32>} : memref<16x1xf32, #tpu.memory_space<vmem>>, vector<16x1xf32>,
    %c0_i32_16 = arith.constant 0 : i32
    %37 = arith.cmpi eq, %arg1, %c0_i32_16 : i32
    %38 = arith.extui %37 : i1 to i32
    %c0_i32_17 = arith.constant 0 : i32
    %39 = arith.cmpi ne, %38, %c0_i32_17 : i32
    scf.if %39 {
      %c0_18 = arith.constant 0 : index
      %c0_19 = arith.constant 0 : index
      %40 = vector.load %arg5[%c0_18, %c0_19] : memref<16x1xf32, #tpu.memory_space<vmem>>, vector<16x1xf32>
      %41 = vector.shape_cast %40 : vector<16x1xf32> to vector<1x16x1xf32>
      %cst_20 = arith.constant dense<0.000000e+00> : vector<1xf32>
      %42 = vector.multi_reduction <add>, %41, %cst_20 [1, 2] : vector<1x16x1xf32> to vector<1xf32>
      %43 = vector.shape_cast %42 : vector<1xf32> to vector<1x1x1xf32>
      %44 = vector.extract %43[0, 0, 0] : f32 from vector<1x1x1xf32>
      %45 = tpu.iota {dimensions = array<i32: 0>} : vector<8x128xi32>
      %46 = tpu.iota {dimensions = array<i32: 1>} : vector<8x128xi32>
      %c0_i32_21 = arith.constant 0 : i32
      %47 = vector.broadcast %c0_i32_21 : i32 to vector<8x128xi32>
      %48 = arith.cmpi eq, %45, %47 : vector<8x128xi32>
      %c0_i32_22 = arith.constant 0 : i32
      %49 = vector.broadcast %c0_i32_22 : i32 to vector<8x128xi32>
      %50 = arith.cmpi eq, %46, %49 : vector<8x128xi32>
      %51 = arith.andi %48, %50 : vector<8x128xi1>
      %cst_23 = arith.constant 0.000000e+00 : f32
      %52 = vector.broadcast %44 : f32 to vector<8x128xf32>
      %53 = vector.broadcast %cst_23 : f32 to vector<8x128xf32>
      %54 = arith.select %51, %52, %53 : vector<8x128xi1>, vector<8x128xf32>
      %c0_24 = arith.constant 0 : index
      %c0_25 = arith.constant 0 : index
      %55 = vector.load %arg4[%c0_24, %c0_25] : memref<8x128xf32, #tpu.memory_space<vmem>>, vector<8x128xf32>
      tpu.vector_store %arg4[%c0_24, %c0_25], %54 {strides = array<i32>} : memref<8x128xf32, #tpu.memory_space<vmem>>, vector<8x128xf32>,
    } else {
    }
    return
  }
  func.func @transform_0(%arg0: i32, %arg1: i32) -> (i32, i32) {
    %c1_i32 = arith.constant 1 : i32
    %0 = arith.muli %arg0, %c1_i32 : i32
    %1 = arith.addi %0, %arg1 : i32
    %c0_i32 = arith.constant 0 : i32
    %c0_i32_0 = arith.constant 0 : i32
    return %1, %c0_i32 : i32, i32
  }
  func.func @transform_1(%arg0: i32, %arg1: i32) -> (i32, i32) {
    %c1_i32 = arith.constant 1 : i32
    %0 = arith.muli %arg0, %c1_i32 : i32
    %1 = arith.addi %0, %arg1 : i32
    %c0_i32 = arith.constant 0 : i32
    %c0_i32_0 = arith.constant 0 : i32
    return %1, %c0_i32 : i32, i32
  }
  func.func @transform_2(%arg0: i32, %arg1: i32) -> (i32, i32) {
    %c0_i32 = arith.constant 0 : i32
    %c0_i32_0 = arith.constant 0 : i32
    return %arg0, %c0_i32 : i32, i32
  }
}

</mosaic_0001>

<llo_original>
// kernel: tpu_custom_call.1
$region0: #{tpu_custom_call.1}
  #allocation0 [shape = 'u32[]', space=smem, size = 0x4, offset = 0x4, fixed_abs, tag = 'smem constant byte address 0x4 - core index']
  #allocation1 [shape = 'u32[72,128]{1,0:T(1,128)}', space=vmem, size = 0x9000, scoped, tag = 'internal scratch']
  #allocation2 [shape = 'f32[16,1]{1,0:T(8,128)}', space=vmem, size = 0x2000, scoped, tag = 'scratch operand']
  %s0 = inlined_call_operand.vmem [shape: f32[16,32], index: 0, kind: input, shape index: {}]
  %s1 = inlined_call_operand.vmem [shape: s32[16,1], index: 1, kind: input, shape index: {}]
  %s2 = inlined_call_operand.hbm [shape: f32[8,128], index: 2, kind: output, shape index: {}]
  %s3 = sld [smem:[#allocation0]]
  $region26: #{tpu_custom_call.1} parent=0
    _
  %s5 = ssub.s32 1, %s3
  %s6 = scalar_select 0, %s5, %s3
  $region1: #{tpu_custom_call.1} parent=0
    #allocation3 [shape = 'u8[4096]{0}', space=vmem, size = 0x1000, scoped, tag = 'output window, operand 0, single buffered']
    #allocation4 [shape = 's32[1]{0}', space=sflag, size = 0x4, scoped, tag = 'scoped memory for tpu_custom_call.1']
    %7 = vsyncpa [#allocation4], 0
    // Predicated region
    $region2: #{tpu_custom_call.1} parent=1 // pred_check
      _
    $region3: #{tpu_custom_call.1} parent=1 // pred_check_branch
      %9 = sbr.rel (0) target = $region5
    $region4: #{tpu_custom_call.1} parent=1 // pred_region
      %s10 = sadd.s32 0, 0
      %s11 = smul.u32 2, %s10
      %p12 = scmp.lt.s32.totalorder %s11, 1
      %s13 = scalar_select %p12, %s11, 1
      %s14 = smul.addr %s13, 8
      %s15 = scalar_lea.vmem %s0, %s14
      %s16 = sadd.s32 0, 0
      %s17 = smul.u32 2, %s16
    $region5: #{tpu_custom_call.1} parent=1 // pred_fallthru
      _
    // Predicated region
    $region6: #{tpu_custom_call.1} parent=1 // pred_check
      _
    $region7: #{tpu_custom_call.1} parent=1 // pred_check_branch
      %19 = sbr.rel (0) target = $region9
    $region8: #{tpu_custom_call.1} parent=1 // pred_region
      %s20 = sadd.s32 0, 0
      %s21 = smul.u32 2, %s20
      %p22 = scmp.lt.s32.totalorder %s21, 1
      %s23 = scalar_select %p22, %s21, 1
      %s24 = smul.addr %s23, 8
      %s25 = scalar_lea.vmem %s1, %s24
      %s26 = sadd.s32 0, 0
      %s27 = smul.u32 2, %s26
    $region9: #{tpu_custom_call.1} parent=1 // pred_fallthru
      _
    %s28 = sadd.s32 0, 0
    %s29 = smul.u32 2, %s28
    %p30 = scmp.lt.s32.totalorder %s29, 1
    %s31 = scalar_select %p30, %s29, 1
    %s32 = smul.addr %s31, 8
    %s33 = scalar_lea.vmem %s0, %s32
    %s34 = sadd.s32 0, 0
    %s35 = smul.u32 2, %s34
    %p36 = scmp.lt.s32.totalorder %s35, 1
    %s37 = scalar_select %p36, %s35, 1
    %s38 = smul.addr %s37, 8
    %s39 = scalar_lea.vmem %s1, %s38
    %s40 = sadd.s32 0, 0
    %s41 = smul.u32 2, %s40
    %p42 = scmp.lt.s32.totalorder %s41, 1
    %s43 = scalar_select %p42, %s41, 1
    %s44 = smul.addr %s43, 8
    %s45 = scalar_lea.vmem %s0, %s44
    %s46 = sadd.s32 0, 0
    %s47 = smul.u32 2, %s46
    %s48 = sadd.s32 0, 0
    %s49 = smul.u32 2, %s48
    %p50 = scmp.lt.s32.totalorder %s49, 1
    %s51 = scalar_select %p50, %s49, 1
    %s52 = smul.addr %s51, 8
    %s53 = scalar_lea.vmem %s1, %s52
    %s54 = sadd.s32 0, 0
    %s55 = smul.u32 2, %s54
    %p56 = scmp.eq.s32.totalorder 0, 0
    // Predicated region
    $region10: #{tpu_custom_call.1} parent=1 // pred_check
      %p57 = pneg %p56
    $region11: #{tpu_custom_call.1} parent=1 // pred_check_branch
      %59 = sbr.rel (%p57) target = $region13
    $region12: #{tpu_custom_call.1} parent=1 // pred_region
      %vm60 = vcmask 7168
      %61 = vst.msk [vmem:[#allocation2] sm:$0xff] %vm60, 0.0
      %62 = vst.msk [vmem:[#allocation2 + $0x8] sm:$0xff] %vm60, 0.0
    $region13: #{tpu_custom_call.1} parent=1 // pred_fallthru
      _
    %v63 = vld [vmem:[%s45] sm:$0xff]
    %v64 = vld [vmem:[%s45 + $0x8] sm:$0xff]
    %v65 = vld [vmem:[%s53] sm:$0xff]
    %v66 = vld [vmem:[%s53 + $0x8] sm:$0xff]
    %vm67 = vcmask 261120
    %v68 = vsel %vm67, %v63, -inf
    %69 = vmax.xlane.f32.xlu0 %v68
    %v70 = vpop.xlane.xlu0 %69
    %v71 = vsel %vm67, %v64, -inf
    %72 = vmax.xlane.f32.xlu0 %v71
    %v73 = vpop.xlane.xlu0 %72
    %v74 = vsub.f32 %v63, %v70
    %v75 = vsub.f32 %v64, %v73
    %v76 = vmul.f32 %v74, 1.442695
    %v77 = vpow.pop %v76
    %v78 = vmul.f32 %v75, 1.442695
    %v79 = vpow.pop %v78
    %v80 = vsel %vm67, %v77, 0.0
    %81 = vadd.xlane.f32.xlu0 %v80
    %v82 = vpop.xlane.xlu0 %81
    %v83 = vsel %vm67, %v79, 0.0
    %84 = vadd.xlane.f32.xlu0 %v83
    %v85 = vpop.xlane.xlu0 %84
    %v86 = vlaneseq
    %v87 = vand.u32 %v86, 127
    %88 = vset.pattern.permute.xlu0 0
    %89 = vperm.xlu0 %88, %v65
    %v90 = vpop.permute.xlu0 %89
    %91 = vset.pattern.permute.xlu0 0
    %92 = vperm.xlu0 %91, %v66
    %v93 = vpop.permute.xlu0 %92
    %vm94 = vcmp.eq.s32.totalorder %v87, %v90
    %vm95 = vcmp.eq.s32.totalorder %v87, %v93
    %v96 = vsel %vm94, %v74, 0.0
    %v97 = vsel %vm95, %v75, 0.0
    %v98 = vsel %vm67, %v96, 0.0
    %99 = vadd.xlane.f32.xlu0 %v98
    %v100 = vpop.xlane.xlu0 %99
    %v101 = vsel %vm67, %v97, 0.0
    %102 = vadd.xlane.f32.xlu0 %v101
    %v103 = vpop.xlane.xlu0 %102
    %v104 = vsel %vm94, %v77, 0.0
    %v105 = vsel %vm95, %v79, 0.0
    %v106 = vsel %vm67, %v104, 0.0
    %107 = vadd.xlane.f32.xlu0 %v106
    %v108 = vpop.xlane.xlu0 %107
    %v109 = vsel %vm67, %v105, 0.0
    %110 = vadd.xlane.f32.xlu0 %v109
    %v111 = vpop.xlane.xlu0 %110
    %v112 = vlog2.pop %v82
    %v113 = vmul.f32 %v112, 0.6931472
    %v114 = vlog2.pop %v85
    %v115 = vmul.f32 %v114, 0.6931472
    %v116 = vsub.f32 %v113, %v100
    %v117 = vsub.f32 %v115, %v103
    %v118 = vrcp.pop %v82
    %v119 = vmul.f32 %v82, %v118
    %v120 = vsub.f32 1.0, %v119
    %v121 = vmul.f32 %v118, %v120
    %v122 = vadd.f32 %v118, %v121
    %vm123 = vweird.f32 %v82
    %vm124 = vweird.f32 %v118
    %vm125 = vmor %vm123, %vm124
    %v126 = vsel %vm125, %v118, %v122
    %v127 = vand.u32 2147483647, %v82
    %vm128 = vcmp.eq.f32.partialorder %v127, 8.507059e+37
    %v129 = vand.u32 %v82, 2147483648
    %v130 = vor.u32 1.1754944e-38, %v129
    %v131 = vsel %vm128, %v130, %v126
    %v132 = vmul.f32 %v108, %v131
    %v133 = vrcp.pop %v85
    %v134 = vmul.f32 %v85, %v133
    %v135 = vsub.f32 1.0, %v134
    %v136 = vmul.f32 %v133, %v135
    %v137 = vadd.f32 %v133, %v136
    %vm138 = vweird.f32 %v85
    %vm139 = vweird.f32 %v133
    %vm140 = vmor %vm138, %vm139
    %v141 = vsel %vm140, %v133, %v137
    %v142 = vand.u32 2147483647, %v85
    %vm143 = vcmp.eq.f32.partialorder %v142, 8.507059e+37
    %v144 = vand.u32 %v85, 2147483648
    %v145 = vor.u32 1.1754944e-38, %v144
    %v146 = vsel %vm143, %v145, %v141
    %v147 = vmul.f32 %v111, %v146
    %v148 = vsub.f32 1.0, %v132
    %v149 = vsub.f32 1.0, %v147
    %v150 = vmul.f32 %v148, %v148
    %v151 = vmul.f32 %v149, %v149
    %v152 = vmul.f32 %v150, 0.25
    %v153 = vmul.f32 %v151, 0.25
    %v154 = vmul.f32 %v152, %v116
    %v155 = vmul.f32 %v153, %v117
    %v156 = vld [vmem:[#allocation2] sm:$0xff]
    %v157 = vld [vmem:[#allocation2 + $0x8] sm:$0xff]
    %v158 = vadd.f32 %v156, %v154
    %v159 = vadd.f32 %v157, %v155
    %vm160 = vcmask 7168
    %161 = vst.msk [vmem:[#allocation2] sm:$0xff] %vm160, %v158
    %162 = vst.msk [vmem:[#allocation2 + $0x8] sm:$0xff] %vm160, %v159
    // Predicated region
    $region14: #{tpu_custom_call.1} parent=1 // pred_check
      %p163 = pneg %p56
    $region15: #{tpu_custom_call.1} parent=1 // pred_check_branch
      %165 = sbr.rel (%p163) target = $region17
    $region16: #{tpu_custom_call.1} parent=1 // pred_region
      %v166 = vld [vmem:[#allocation2] sm:$0xff]
      %v167 = vld [vmem:[#allocation2 + $0x8] sm:$0xff]
      %v168 = vsel %vm160, %v166, 0.0
      %v169 = vsel %vm160, %v167, 0.0
      %v170 = vadd.f32 %v168, %v169
      %171 = vadd.xlane.f32.xlu0 %v170
      %v172 = vpop.xlane.xlu0 %171
      %v173 = vrot.slane %v172, 4
      %v174 = vadd.f32 %v172, %v173
      %v175 = vrot.slane %v174, 2
      %v176 = vadd.f32 %v174, %v175
      %v177 = vrot.slane %v176, 1
      %v178 = vadd.f32 %v176, %v177
      %s179 = vtos %v178
      %v180 = vlaneseq
      %v181 = vshrl.u32 %v180, 7
      %vm182 = vcmp.eq.s32.totalorder %v181, 0
      %vm183 = vcmp.eq.s32.totalorder %v87, 0
      %vm184 = vmand %vm182, %vm183
      %v185 = vstv %s179
      %v186 = vsel %vm184, %v185, 0.0
      %187 = vst [vmem:[#allocation3] sm:$0xff] %v186
    $region17: #{tpu_custom_call.1} parent=1 // pred_fallthru
      _
    // Predicated region
    $region18: #{tpu_custom_call.1} parent=1 // pred_check
      _
    $region19: #{tpu_custom_call.1} parent=1 // pred_check_branch
      %189 = sbr.rel (0) target = $region21
    $region20: #{tpu_custom_call.1} parent=1 // pred_region
      %191 = vsyncadd [#allocation4], 0
      %s193 = sshll.u32 [#allocation3], 4
      %s194 = int_to_ptr.vmem [resolvable:$true] %s193
      %s195 = sshll.u32 %s2, 4
      %s196 = int_to_ptr.hbm [resolvable:$true] %s195
      %198 = dma.vmem_to_hbm [thread:$0]  %s194, 128, %s196, [#allocation4]
    $region21: #{tpu_custom_call.1} parent=1 // pred_fallthru
      _
    // Predicated region
    $region22: #{tpu_custom_call.1} parent=1 // pred_check
      _
    $region23: #{tpu_custom_call.1} parent=1 // pred_check_branch
      %200 = sbr.rel (0) target = $region25
    $region24: #{tpu_custom_call.1} parent=1 // pred_region
      %202 = dma.done [#allocation4], 128
    $region25: #{tpu_custom_call.1} parent=1 // pred_fallthru
      _
    %203 = vsyncpa [#allocation4], 1

</llo_original>
